<compile_context>
chip_gen: v7x
topology: tpu7x:2x2x1
jax: 0.10.0
libtpu: 0.0.40
codegen_flags: <defaults>
</compile_context>

<pallas_src>
import jax
import jax.numpy as jnp
from jax.experimental import pallas as pl
from jax.experimental.pallas import tpu as pltpu


def _onehot_matmul_gather_kernel(ids_ref, w_ref, out_ref):
    """One grid step: gather rows*pack embedding rows with a single MXU matmul.

    ids_ref : VMEM int32 [rows, pack]     ids pre-offset by slot*V so they index
                                          straight into the block-diagonal table
    w_ref   : VMEM float [pack*V, pack*E] block-diagonal widened embedding table
    out_ref : VMEM float [rows, pack*E]   `pack` token embeddings per row
    """
    rows, pack = ids_ref.shape
    kdim = w_ref.shape[0]                      # pack * vocab
    ids = ids_ref[...]
    col = jax.lax.broadcasted_iota(jnp.int32, (rows, kdim), 1)

    # Build the [rows, pack*V] one-hot selector on the VPU. The `pack` slots
    # live in disjoint column bands, so summing the per-slot comparisons gives
    # exactly one 1.0 per (row, slot).
    onehot = jnp.zeros((rows, kdim), dtype=jnp.float32)
    for o in range(pack):                      # pack is small and static
        onehot = onehot + (col == ids[:, o:o + 1]).astype(jnp.float32)

    # MXU gather: [rows, pack*V] @ [pack*V, pack*E] -> [rows, pack*E].
    gathered = jnp.dot(onehot.astype(w_ref.dtype), w_ref[...],
                       preferred_element_type=jnp.float32)
    out_ref[...] = gathered.astype(out_ref.dtype)   # full 128-lane stores


def _embedding_pallas_call(ids_wide, w_wide, rows_padded, rows_per_block,
                           pack, out_dtype, single_buffer_table):
    kdim, wide_e = w_wide.shape
    num_blocks = rows_padded // rows_per_block

    table_kwargs = {}
    if single_buffer_table:
        # Table block is grid-invariant; default double-buffering only doubles
        # its VMEM footprint with nothing to prefetch.
        table_kwargs["pipeline_mode"] = pl.Buffered(1)
    table_spec = pl.BlockSpec((kdim, wide_e), lambda i: (0, 0), **table_kwargs)

    grid_spec = pltpu.PrefetchScalarGridSpec(
        num_scalar_prefetch=0,
        grid=(num_blocks,),
        in_specs=[
            pl.BlockSpec((rows_per_block, pack), lambda i: (i, 0)),
            table_spec,
        ],
        out_specs=pl.BlockSpec((rows_per_block, wide_e), lambda i: (i, 0)),
    )

    itemsize = jnp.dtype(out_dtype).itemsize
    # HBM traffic only: ids in, one table load, output out. The VMEM->VMEM
    # gather traffic is intentionally not counted.
    bytes_accessed = int(ids_wide.size * 4 + w_wide.size * itemsize
                         + rows_padded * wide_e * itemsize)
    flops = int(2 * rows_padded * kdim * wide_e)

    # Raise the scoped VMEM limit only when a real-sized table needs it.
    block_bytes = (rows_per_block * wide_e * itemsize       # output block
                   + rows_per_block * pack * 4              # ids block
                   + rows_per_block * kdim * 4)             # one-hot intermediate
    table_bufs = 1 if single_buffer_table else 2
    vmem_needed = table_bufs * w_wide.size * itemsize + 2 * block_bytes
    vmem_limit = None
    if vmem_needed > 32 * 1024 * 1024:
        vmem_limit = min(int(vmem_needed * 1.25), 128 * 1024 * 1024)

    # With a VMEM-resident table, "parallel" makes each TensorCore DMA its own
    # table copy; only worth it when there are enough token tiles to amortize.
    semantics = ("parallel",) if num_blocks >= 4 else ("arbitrary",)

    return pl.pallas_call(
        _onehot_matmul_gather_kernel,
        grid_spec=grid_spec,
        out_shape=jax.ShapeDtypeStruct((rows_padded, wide_e), out_dtype),
        compiler_params=pltpu.CompilerParams(
            dimension_semantics=semantics,
            vmem_limit_bytes=vmem_limit,
        ),
        cost_estimate=pl.CostEstimate(
            flops=flops, transcendentals=0, bytes_accessed=bytes_accessed),
    )(ids_wide, w_wide)


def bert_embedding_lookup(input_ids, embedding_table, block_rows=512):
    """Pallas equivalent of nn.Embedding(V, E)(input_ids): [B, S] -> [B, S, E]."""
    B, S = input_ids.shape
    V, E = embedding_table.shape
    n_tokens = B * S
    out_dtype = embedding_table.dtype

    # Lane packing factor: `pack` consecutive tokens share one output row so
    # every MXU result row / VMEM store is a full 128-lane vector.
    pack = 128 // E if (E < 128 and 128 % E == 0) else 1
    wide_e = pack * E

    # Clamp so out-of-range / padded ids can never index past the table
    # (VMEM reads have no runtime bounds check).
    flat_ids = jnp.clip(input_ids.reshape(-1).astype(jnp.int32), 0, V - 1)

    # Pad tokens to whole packed rows, and rows to whole blocks (no padding in
    # the single-block case, so no pad-then-slice restream).
    n_tok_pad = pl.cdiv(n_tokens, pack) * pack
    rows_total = n_tok_pad // pack
    if rows_total <= block_rows:
        rows_per_block = rows_total            # one step; block == full array
        rows_padded = rows_total
    else:
        rows_per_block = block_rows            # multiple of 8
        rows_padded = pl.cdiv(rows_total, rows_per_block) * rows_per_block
    tok_padded = rows_padded * pack

    if tok_padded != n_tokens:
        flat_ids = jnp.pad(flat_ids, (0, tok_padded - n_tokens))

    # Offset each token id by slot*V so it selects the matching diagonal block
    # of the widened table.
    slot = (jnp.arange(tok_padded, dtype=jnp.int32) % pack) * V
    ids_wide = (flat_ids + slot).reshape(rows_padded, pack)

    # Block-diagonal widened table [pack*V, pack*E] (pack == 1 -> unchanged).
    if pack == 1:
        w_wide = embedding_table
    else:
        w_wide = jnp.kron(jnp.eye(pack, dtype=out_dtype), embedding_table)

    try:
        out_packed = _embedding_pallas_call(
            ids_wide, w_wide, rows_padded, rows_per_block, pack,
            out_dtype, single_buffer_table=True)
    except Exception:
        # This JAX/Mosaic build rejects pipeline_mode=pl.Buffered(1); fall back
        # to default double-buffering of the (small, grid-invariant) table.
        out_packed = _embedding_pallas_call(
            ids_wide, w_wide, rows_padded, rows_per_block, pack,
            out_dtype, single_buffer_table=False)

    out_flat = out_packed.reshape(-1)           # row-major -> token-major, free
    if tok_padded != n_tokens:
        out_flat = out_flat[: n_tokens * E]     # only when padding was needed
    return out_flat.reshape(B, S, E)


class BertEmbeddingTestPallas:
    """Deterministic, forward-only re-implementation of BertEmbeddingTest."""

    def __init__(self, vocab_size, word_embedding_dim, hidden_size=64, seed=0):
        key = jax.random.PRNGKey(seed)
        k_emb, k_w, k_b = jax.random.split(key, 3)
        # nn.Embedding weight: [vocab_size, word_embedding_dim]
        self.word_embeddings = jax.random.normal(
            k_emb, (vocab_size, word_embedding_dim), dtype=jnp.float32)
        # nn.Linear(word_embedding_dim, hidden_size) parameters exist in
        # __init__ but are unused by forward; kept only for shape fidelity.
        self.proj_weight = 0.02 * jax.random.normal(
            k_w, (hidden_size, word_embedding_dim), dtype=jnp.float32)
        self.proj_bias = 0.02 * jax.random.normal(
            k_b, (hidden_size,), dtype=jnp.float32)

    def forward(self, input_ids):
        if isinstance(input_ids, (list, tuple)):
            input_ids = jnp.asarray(input_ids, dtype=jnp.int32)
        return bert_embedding_lookup(input_ids, self.word_embeddings)


if __name__ == "__main__":
    # Small shapes: batch=2, seq=8, vocab=64, embedding_dim=32
    vocab_size = 64
    word_embedding_dim = 32
    hidden_size = 64
    B, S = 2, 8

    model = BertEmbeddingTestPallas(vocab_size, word_embedding_dim,
                                    hidden_size, seed=0)

    key = jax.random.PRNGKey(0)
    input_ids = jax.random.randint(key, (B, S), 0, vocab_size, dtype=jnp.int32)

    out = jax.block_until_ready(model.forward(input_ids))

    # Reference: plain JAX gather (same semantics as nn.Embedding).
    ref = jnp.take(model.word_embeddings, input_ids, axis=0)
    assert out.shape == (B, S, word_embedding_dim), out.shape
    assert jnp.allclose(out, ref, atol=1e-6), "Pallas embedding gather mismatch"

    print("KERNEL_OK")
</pallas_src>

<mosaic_0001>
module attributes {stable_mosaic.version = 11 : i64} {
  func.func @_onehot_matmul_gather_kernel(%arg0: i32, %arg1: memref<4x4xi32, #tpu.memory_space<vmem>>, %arg2: memref<256x128xf32, #tpu.memory_space<vmem>>, %arg3: memref<4x128xf32, #tpu.memory_space<vmem>>) attributes {dimension_semantics = [#tpu.dimension_semantics<arbitrary>], iteration_bounds = array<i64: 1>, scalar_prefetch = 0 : i64, scratch_operands = 0 : i64, tpu.core_type = #tpu.core_type<tc>, window_params = [{transform_indices = @transform_0, window_bounds = array<i64: 4, 4>}, {pipeline_mode = #tpu.pipeline_mode<synchronous>, transform_indices = @transform_1, window_bounds = array<i64: 256, 128>}, {transform_indices = @transform_2, window_bounds = array<i64: 4, 128>}]} {
    %c0 = arith.constant 0 : index
    %c0_0 = arith.constant 0 : index
    %0 = vector.load %arg1[%c0, %c0_0] : memref<4x4xi32, #tpu.memory_space<vmem>>, vector<4x4xi32>
    %1 = tpu.iota {dimensions = array<i32: 1>} : vector<4x256xi32>
    %cst = arith.constant 0.000000e+00 : f32
    %2 = vector.broadcast %cst : f32 to vector<4x256xf32>
    %3 = vector.extract_strided_slice %0 {offsets = [0, 0], sizes = [4, 1], strides = [1, 1]} : vector<4x4xi32> to vector<4x1xi32>
    %4 = vector.broadcast %3 : vector<4x1xi32> to vector<4x256xi32>
    %5 = arith.cmpi eq, %1, %4 : vector<4x256xi32>
    %6 = arith.extui %5 : vector<4x256xi1> to vector<4x256xi32>
    %7 = arith.sitofp %6 : vector<4x256xi32> to vector<4x256xf32>
    %8 = arith.addf %2, %7 : vector<4x256xf32>
    %9 = vector.extract_strided_slice %0 {offsets = [0, 1], sizes = [4, 1], strides = [1, 1]} : vector<4x4xi32> to vector<4x1xi32>
    %10 = vector.broadcast %9 : vector<4x1xi32> to vector<4x256xi32>
    %11 = arith.cmpi eq, %1, %10 : vector<4x256xi32>
    %12 = arith.extui %11 : vector<4x256xi1> to vector<4x256xi32>
    %13 = arith.sitofp %12 : vector<4x256xi32> to vector<4x256xf32>
    %14 = arith.addf %8, %13 : vector<4x256xf32>
    %15 = vector.extract_strided_slice %0 {offsets = [0, 2], sizes = [4, 1], strides = [1, 1]} : vector<4x4xi32> to vector<4x1xi32>
    %16 = vector.broadcast %15 : vector<4x1xi32> to vector<4x256xi32>
    %17 = arith.cmpi eq, %1, %16 : vector<4x256xi32>
    %18 = arith.extui %17 : vector<4x256xi1> to vector<4x256xi32>
    %19 = arith.sitofp %18 : vector<4x256xi32> to vector<4x256xf32>
    %20 = arith.addf %14, %19 : vector<4x256xf32>
    %21 = vector.extract_strided_slice %0 {offsets = [0, 3], sizes = [4, 1], strides = [1, 1]} : vector<4x4xi32> to vector<4x1xi32>
    %22 = vector.broadcast %21 : vector<4x1xi32> to vector<4x256xi32>
    %23 = arith.cmpi eq, %1, %22 : vector<4x256xi32>
    %24 = arith.extui %23 : vector<4x256xi1> to vector<4x256xi32>
    %25 = arith.sitofp %24 : vector<4x256xi32> to vector<4x256xf32>
    %26 = arith.addf %20, %25 : vector<4x256xf32>
    %c0_1 = arith.constant 0 : index
    %c0_2 = arith.constant 0 : index
    %27 = vector.load %arg2[%c0_1, %c0_2] : memref<256x128xf32, #tpu.memory_space<vmem>>, vector<256x128xf32>
    %cst_3 = arith.constant dense<0.000000e+00> : vector<4x128xf32>
    %28 = tpu.matmul %26, %27, %cst_3 {dimension_numbers = #tpu.dot_dimension_numbers<[1], [0], [0], [1], [0, 0, 1, 1], [], []>} : vector<4x256xf32>, vector<256x128xf32>, vector<4x128xf32> -> vector<4x128xf32>
    %c0_4 = arith.constant 0 : index
    %c0_5 = arith.constant 0 : index
    %29 = vector.load %arg3[%c0_4, %c0_5] : memref<4x128xf32, #tpu.memory_space<vmem>>, vector<4x128xf32>
    tpu.vector_store %arg3[%c0_4, %c0_5], %28 {strides = array<i32>} : memref<4x128xf32, #tpu.memory_space<vmem>>, vector<4x128xf32>,
    return
  }
  func.func @transform_0(%arg0: i32) -> (i32, i32) {
    %c0_i32 = arith.constant 0 : i32
    %c0_i32_0 = arith.constant 0 : i32
    return %arg0, %c0_i32 : i32, i32
  }
  func.func @transform_1(%arg0: i32) -> (i32, i32) {
    %c0_i32 = arith.constant 0 : i32
    %c0_i32_0 = arith.constant 0 : i32
    %c0_i32_1 = arith.constant 0 : i32
    return %c0_i32, %c0_i32_0 : i32, i32
  }
  func.func @transform_2(%arg0: i32) -> (i32, i32) {
    %c0_i32 = arith.constant 0 : i32
    %c0_i32_0 = arith.constant 0 : i32
    return %arg0, %c0_i32 : i32, i32
  }
}

module attributes {stable_mosaic.version = 11 : i64} {
  func.func @_onehot_matmul_gather_kernel(%arg0: i32, %arg1: memref<4x4xi32, #tpu.memory_space<vmem>>, %arg2: memref<256x128xf32, #tpu.memory_space<vmem>>, %arg3: memref<4x128xf32, #tpu.memory_space<vmem>>) attributes {dimension_semantics = [#tpu.dimension_semantics<arbitrary>], iteration_bounds = array<i64: 1>, scalar_prefetch = 0 : i64, scratch_operands = 0 : i64, tpu.core_type = #tpu.core_type<tc>, window_params = [{transform_indices = @transform_0, window_bounds = array<i64: 4, 4>}, {pipeline_mode = #tpu.pipeline_mode<synchronous>, transform_indices = @transform_1, window_bounds = array<i64: 256, 128>}, {transform_indices = @transform_2, window_bounds = array<i64: 4, 128>}]} {
    %c0 = arith.constant 0 : index
    %c0_0 = arith.constant 0 : index
    %0 = vector.load %arg1[%c0, %c0_0] : memref<4x4xi32, #tpu.memory_space<vmem>>, vector<4x4xi32>
    %1 = tpu.iota {dimensions = array<i32: 1>} : vector<4x256xi32>
    %cst = arith.constant 0.000000e+00 : f32
    %2 = vector.broadcast %cst : f32 to vector<4x256xf32>
    %3 = vector.extract_strided_slice %0 {offsets = [0, 0], sizes = [4, 1], strides = [1, 1]} : vector<4x4xi32> to vector<4x1xi32>
    %4 = vector.broadcast %3 : vector<4x1xi32> to vector<4x256xi32>
    %5 = arith.cmpi eq, %1, %4 : vector<4x256xi32>
    %6 = arith.extui %5 : vector<4x256xi1> to vector<4x256xi32>
    %7 = arith.sitofp %6 : vector<4x256xi32> to vector<4x256xf32>
    %8 = arith.addf %2, %7 : vector<4x256xf32>
    %9 = vector.extract_strided_slice %0 {offsets = [0, 1], sizes = [4, 1], strides = [1, 1]} : vector<4x4xi32> to vector<4x1xi32>
    %10 = vector.broadcast %9 : vector<4x1xi32> to vector<4x256xi32>
    %11 = arith.cmpi eq, %1, %10 : vector<4x256xi32>
    %12 = arith.extui %11 : vector<4x256xi1> to vector<4x256xi32>
    %13 = arith.sitofp %12 : vector<4x256xi32> to vector<4x256xf32>
    %14 = arith.addf %8, %13 : vector<4x256xf32>
    %15 = vector.extract_strided_slice %0 {offsets = [0, 2], sizes = [4, 1], strides = [1, 1]} : vector<4x4xi32> to vector<4x1xi32>
    %16 = vector.broadcast %15 : vector<4x1xi32> to vector<4x256xi32>
    %17 = arith.cmpi eq, %1, %16 : vector<4x256xi32>
    %18 = arith.extui %17 : vector<4x256xi1> to vector<4x256xi32>
    %19 = arith.sitofp %18 : vector<4x256xi32> to vector<4x256xf32>
    %20 = arith.addf %14, %19 : vector<4x256xf32>
    %21 = vector.extract_strided_slice %0 {offsets = [0, 3], sizes = [4, 1], strides = [1, 1]} : vector<4x4xi32> to vector<4x1xi32>
    %22 = vector.broadcast %21 : vector<4x1xi32> to vector<4x256xi32>
    %23 = arith.cmpi eq, %1, %22 : vector<4x256xi32>
    %24 = arith.extui %23 : vector<4x256xi1> to vector<4x256xi32>
    %25 = arith.sitofp %24 : vector<4x256xi32> to vector<4x256xf32>
    %26 = arith.addf %20, %25 : vector<4x256xf32>
    %c0_1 = arith.constant 0 : index
    %c0_2 = arith.constant 0 : index
    %27 = vector.load %arg2[%c0_1, %c0_2] : memref<256x128xf32, #tpu.memory_space<vmem>>, vector<256x128xf32>
    %cst_3 = arith.constant dense<0.000000e+00> : vector<4x128xf32>
    %28 = tpu.matmul %26, %27, %cst_3 {dimension_numbers = #tpu.dot_dimension_numbers<[1], [0], [0], [1], [0, 0, 1, 1], [], []>} : vector<4x256xf32>, vector<256x128xf32>, vector<4x128xf32> -> vector<4x128xf32>
    %c0_4 = arith.constant 0 : index
    %c0_5 = arith.constant 0 : index
    %29 = vector.load %arg3[%c0_4, %c0_5] : memref<4x128xf32, #tpu.memory_space<vmem>>, vector<4x128xf32>
    tpu.vector_store %arg3[%c0_4, %c0_5], %28 {strides = array<i32>} : memref<4x128xf32, #tpu.memory_space<vmem>>, vector<4x128xf32>,
    return
  }
  func.func @transform_0(%arg0: i32) -> (i32, i32) {
    %c0_i32 = arith.constant 0 : i32
    %c0_i32_0 = arith.constant 0 : i32
    return %arg0, %c0_i32 : i32, i32
  }
  func.func @transform_1(%arg0: i32) -> (i32, i32) {
    %c0_i32 = arith.constant 0 : i32
    %c0_i32_0 = arith.constant 0 : i32
    %c0_i32_1 = arith.constant 0 : i32
    return %c0_i32, %c0_i32_0 : i32, i32
  }
  func.func @transform_2(%arg0: i32) -> (i32, i32) {
    %c0_i32 = arith.constant 0 : i32
    %c0_i32_0 = arith.constant 0 : i32
    return %arg0, %c0_i32 : i32, i32
  }
}

</mosaic_0001>

<llo_original>
// kernel: tpu_custom_call.1
$region0: #{tpu_custom_call.1}
  #allocation0 [shape = 'u32[]', space=smem, size = 0x4, offset = 0x4, fixed_abs, tag = 'smem constant byte address 0x4 - core index']
  #allocation1 [shape = 'u32[144,128]{1,0:T(1,128)}', space=vmem, size = 0x12000, scoped, tag = 'internal scratch']
  %s0 = inlined_call_operand.hbm [shape: s32[4,4], index: 0, kind: input, shape index: {}]
  %s1 = inlined_call_operand.hbm [shape: f32[256,128], index: 1, kind: input, shape index: {}]
  %s2 = inlined_call_operand.hbm [shape: f32[4,128], index: 2, kind: output, shape index: {}]
  %s3 = sld [smem:[#allocation0]]
  $region26: #{tpu_custom_call.1} parent=0
    _
  %s5 = ssub.s32 1, %s3
  %s6 = scalar_select 0, %s5, %s3
  $region1: #{tpu_custom_call.1} parent=0
    #allocation2 [shape = 'u8[2048]{0}', space=vmem, size = 0x800, scoped, tag = 'input window, operand 0, single buffered']
    #allocation3 [shape = 's32[1]{0}', space=sflag, size = 0x4, scoped, tag = 'scoped memory for tpu_custom_call.1']
    #allocation4 [shape = 's32[1]{0}', space=sflag, size = 0x4, scoped, tag = 'scoped memory for tpu_custom_call.1']
    #allocation5 [shape = 'u8[131072]{0}', space=vmem, size = 0x20000, scoped, tag = 'input window, operand 1, single buffered']
    #allocation6 [shape = 's32[1]{0}', space=sflag, size = 0x4, scoped, tag = 'scoped memory for tpu_custom_call.1']
    #allocation7 [shape = 'u8[2048]{0}', space=vmem, size = 0x800, scoped, tag = 'output window, operand 0, single buffered']
    %7 = vsyncpa [#allocation3], 0
    %8 = vsyncpa [#allocation6], 0
    %9 = vsyncpa [#allocation4], 0
    // Predicated region
    $region2: #{tpu_custom_call.1} parent=1 // pred_check
      _
    $region3: #{tpu_custom_call.1} parent=1 // pred_check_branch
      %11 = sbr.rel (0) target = $region5
    $region4: #{tpu_custom_call.1} parent=1 // pred_region
      %s13 = ssub.s32 64, 64
      %14 = vsyncadd [#allocation3], %s13
      %s16 = sshll.u32 [#allocation2], 4
      %s17 = int_to_ptr.vmem [resolvable:$true] %s16
      %19 = dma.hbm_to_vmem [thread:$0]  %s0, 64, %s17, [#allocation3]
    $region5: #{tpu_custom_call.1} parent=1 // pred_fallthru
      _
    // Predicated region
    $region6: #{tpu_custom_call.1} parent=1 // pred_check
      _
    $region7: #{tpu_custom_call.1} parent=1 // pred_check_branch
      %21 = sbr.rel (0) target = $region9
    $region8: #{tpu_custom_call.1} parent=1 // pred_region
      %s23 = ssub.s32 4096, 4096
      %24 = vsyncadd [#allocation6], %s23
      %s25 = sshll.u32 [#allocation5], 4
      %s26 = int_to_ptr.vmem [resolvable:$true] %s25
      %31 = dma.hbm_to_vmem [thread:$0]  %s1, 4096, %s26, [#allocation6], 128, 128, 8
    $region9: #{tpu_custom_call.1} parent=1 // pred_fallthru
      _
    // Predicated region
    $region10: #{tpu_custom_call.1} parent=1 // pred_check
      _
    $region11: #{tpu_custom_call.1} parent=1 // pred_check_branch
      %33 = sbr.rel (0) target = $region13
    $region12: #{tpu_custom_call.1} parent=1 // pred_region
      %34 = dma.done [#allocation3], 64
    $region13: #{tpu_custom_call.1} parent=1 // pred_fallthru
      _
    // Predicated region
    $region14: #{tpu_custom_call.1} parent=1 // pred_check
      _
    $region15: #{tpu_custom_call.1} parent=1 // pred_check_branch
      %36 = sbr.rel (0) target = $region17
    $region16: #{tpu_custom_call.1} parent=1 // pred_region
      %37 = dma.done [#allocation6], 4096
    $region17: #{tpu_custom_call.1} parent=1 // pred_fallthru
      _
    %v38 = vld [vmem:[#allocation2] sm:$0xf]
    %v39 = vlaneseq
    %v40 = vand.u32 %v39, 127
    %v41 = vadd.s32 %v40, 128
    %42 = vset.pattern.permute.xlu0 0
    %43 = vperm.xlu0 %42, %v38
    %v44 = vpop.permute.xlu0 %43
    %vm45 = vcmp.eq.s32.totalorder %v40, %v44
    %vm46 = vcmp.eq.s32.totalorder %v41, %v44
    %v47 = vsel %vm45, 1, 0
    %v48 = vsel %vm46, 1, 0
    %v49 = vcvt.s32.f32 %v47
    %v50 = vcvt.s32.f32 %v48
    %v51 = vadd.f32 %v49, 0.0
    %v52 = vadd.f32 %v50, 0.0
    %53 = vset.pattern.permute.xlu0 1
    %54 = vperm.xlu0 %53, %v38
    %v55 = vpop.permute.xlu0 %54
    %vm56 = vcmp.eq.s32.totalorder %v40, %v55
    %vm57 = vcmp.eq.s32.totalorder %v41, %v55
    %v58 = vsel %vm56, 1, 0
    %v59 = vsel %vm57, 1, 0
    %v60 = vcvt.s32.f32 %v58
    %v61 = vcvt.s32.f32 %v59
    %v62 = vadd.f32 %v51, %v60
    %v63 = vadd.f32 %v52, %v61
    %64 = vset.pattern.permute.xlu0 2
    %65 = vperm.xlu0 %64, %v38
    %v66 = vpop.permute.xlu0 %65
    %vm67 = vcmp.eq.s32.totalorder %v40, %v66
    %vm68 = vcmp.eq.s32.totalorder %v41, %v66
    %v69 = vsel %vm67, 1, 0
    %v70 = vsel %vm68, 1, 0
    %v71 = vcvt.s32.f32 %v69
    %v72 = vcvt.s32.f32 %v70
    %v73 = vadd.f32 %v62, %v71
    %v74 = vadd.f32 %v63, %v72
    %75 = vset.pattern.permute.xlu0 3
    %76 = vperm.xlu0 %75, %v38
    %v77 = vpop.permute.xlu0 %76
    %vm78 = vcmp.eq.s32.totalorder %v40, %v77
    %vm79 = vcmp.eq.s32.totalorder %v41, %v77
    %v80 = vsel %vm78, 1, 0
    %v81 = vsel %vm79, 1, 0
    %v82 = vcvt.s32.f32 %v80
    %v83 = vcvt.s32.f32 %v81
    %v84 = vadd.f32 %v73, %v82
    %v85 = vadd.f32 %v74, %v83
    %v86 = vld [vmem:[#allocation5] sm:$0xff]
    %v87 = vld [vmem:[#allocation5 + $0x8] sm:$0xff]
    %v88 = vld [vmem:[#allocation5 + $0x10] sm:$0xff]
    %v89 = vld [vmem:[#allocation5 + $0x18] sm:$0xff]
    %v90 = vld [vmem:[#allocation5 + $0x20] sm:$0xff]
    %v91 = vld [vmem:[#allocation5 + $0x28] sm:$0xff]
    %v92 = vld [vmem:[#allocation5 + $0x30] sm:$0xff]
    %v93 = vld [vmem:[#allocation5 + $0x38] sm:$0xff]
    %v94 = vld [vmem:[#allocation5 + $0x40] sm:$0xff]
    %v95 = vld [vmem:[#allocation5 + $0x48] sm:$0xff]
    %v96 = vld [vmem:[#allocation5 + $0x50] sm:$0xff]
    %v97 = vld [vmem:[#allocation5 + $0x58] sm:$0xff]
    %v98 = vld [vmem:[#allocation5 + $0x60] sm:$0xff]
    %v99 = vld [vmem:[#allocation5 + $0x68] sm:$0xff]
    %v100 = vld [vmem:[#allocation5 + $0x70] sm:$0xff]
    %v101 = vld [vmem:[#allocation5 + $0x78] sm:$0xff]
    %v102 = vld [vmem:[#allocation5 + $0x80] sm:$0xff]
    %v103 = vld [vmem:[#allocation5 + $0x88] sm:$0xff]
    %v104 = vld [vmem:[#allocation5 + $0x90] sm:$0xff]
    %v105 = vld [vmem:[#allocation5 + $0x98] sm:$0xff]
    %v106 = vld [vmem:[#allocation5 + $0xa0] sm:$0xff]
    %v107 = vld [vmem:[#allocation5 + $0xa8] sm:$0xff]
    %v108 = vld [vmem:[#allocation5 + $0xb0] sm:$0xff]
    %v109 = vld [vmem:[#allocation5 + $0xb8] sm:$0xff]
    %v110 = vld [vmem:[#allocation5 + $0xc0] sm:$0xff]
    %v111 = vld [vmem:[#allocation5 + $0xc8] sm:$0xff]
    %v112 = vld [vmem:[#allocation5 + $0xd0] sm:$0xff]
    %v113 = vld [vmem:[#allocation5 + $0xd8] sm:$0xff]
    %v114 = vld [vmem:[#allocation5 + $0xe0] sm:$0xff]
    %v115 = vld [vmem:[#allocation5 + $0xe8] sm:$0xff]
    %v116 = vld [vmem:[#allocation5 + $0xf0] sm:$0xff]
    %v117 = vld [vmem:[#allocation5 + $0xf8] sm:$0xff]
    %118 = vmatprep.subr.mxu0 0.0
    %119 = vmatpush1.msra.mxu0 %v86
    %120 = vmatprep.subr.mxu0 0.0
    %121 = vmatpush1.msra.mxu0 %v87
    %122 = vmatprep.subr.mxu0 0.0
    %123 = vmatpush1.msra.mxu0 %v88
    %124 = vmatprep.subr.mxu0 0.0
    %125 = vmatpush1.msra.mxu0 %v89
    %126 = vmatprep.subr.mxu0 0.0
    %127 = vmatpush1.msra.mxu0 %v90
    %128 = vmatprep.subr.mxu0 0.0
    %129 = vmatpush1.msra.mxu0 %v91
    %130 = vmatprep.subr.mxu0 0.0
    %131 = vmatpush1.msra.mxu0 %v92
    %132 = vmatprep.subr.mxu0 0.0
    %133 = vmatpush1.msra.mxu0 %v93
    %134 = vmatprep.subr.mxu0 0.0
    %135 = vmatpush1.msra.mxu0 %v94
    %136 = vmatprep.subr.mxu0 0.0
    %137 = vmatpush1.msra.mxu0 %v95
    %138 = vmatprep.subr.mxu0 0.0
    %139 = vmatpush1.msra.mxu0 %v96
    %140 = vmatprep.subr.mxu0 0.0
    %141 = vmatpush1.msra.mxu0 %v97
    %142 = vmatprep.subr.mxu0 0.0
    %143 = vmatpush1.msra.mxu0 %v98
    %144 = vmatprep.subr.mxu0 0.0
    %145 = vmatpush1.msra.mxu0 %v99
    %146 = vmatprep.subr.mxu0 0.0
    %147 = vmatpush1.msra.mxu0 %v100
    %148 = vmatprep.subr.mxu0 0.0
    %149 = vmatpush1.msra.mxu0 %v101
    %150 = vmatprep.subr.mxu0 0.0
    %151 = vmatpush1.msra.mxu0 %v102
    %152 = vmatprep.subr.mxu0 0.0
    %153 = vmatpush1.msra.mxu0 %v103
    %154 = vmatprep.subr.mxu0 0.0
    %155 = vmatpush1.msra.mxu0 %v104
    %156 = vmatprep.subr.mxu0 0.0
    %157 = vmatpush1.msra.mxu0 %v105
    %158 = vmatprep.subr.mxu0 0.0
    %159 = vmatpush1.msra.mxu0 %v106
    %160 = vmatprep.subr.mxu0 0.0
    %161 = vmatpush1.msra.mxu0 %v107
    %162 = vmatprep.subr.mxu0 0.0
    %163 = vmatpush1.msra.mxu0 %v108
    %164 = vmatprep.subr.mxu0 0.0
    %165 = vmatpush1.msra.mxu0 %v109
    %166 = vmatprep.subr.mxu0 0.0
    %167 = vmatpush1.msra.mxu0 %v110
    %168 = vmatprep.subr.mxu0 0.0
    %169 = vmatpush1.msra.mxu0 %v111
    %170 = vmatprep.subr.mxu0 0.0
    %171 = vmatpush1.msra.mxu0 %v112
    %172 = vmatprep.subr.mxu0 0.0
    %173 = vmatpush1.msra.mxu0 %v113
    %174 = vmatprep.subr.mxu0 0.0
    %175 = vmatpush1.msra.mxu0 %v114
    %176 = vmatprep.subr.mxu0 0.0
    %177 = vmatpush1.msra.mxu0 %v115
    %178 = vmatprep.subr.mxu0 0.0
    %179 = vmatpush1.msra.mxu0 %v116
    %180 = vmatprep.subr.mxu0 0.0
    %181 = vmatpush1.msra.mxu0 %v117
    %182 = vmatprep.mubr.f32.mxu0 %v85
    %183 = vmatmul.mubr.f32.gmra.mrb[0].mxu0 %v84
    %v184 = vpop.f32.mrb[0].mxu0
    %v185 = vadd.f32 0.0, %v184
    %v186 = vpop.f32.mrb[0].mxu0
    %187 = vdwg.mxu0
    %188 = vst [vmem:[#allocation7] sm:$0xf] %v185
    // Predicated region
    $region18: #{tpu_custom_call.1} parent=1 // pred_check
      _
    $region19: #{tpu_custom_call.1} parent=1 // pred_check_branch
      %190 = sbr.rel (0) target = $region21
    $region20: #{tpu_custom_call.1} parent=1 // pred_region
      %s192 = ssub.s32 64, 64
      %193 = vsyncadd [#allocation4], %s192
      %s195 = sshll.u32 [#allocation7], 4
      %s196 = int_to_ptr.vmem [resolvable:$true] %s195
      %198 = dma.vmem_to_hbm [thread:$0]  %s196, 64, %s2, [#allocation4]
    $region21: #{tpu_custom_call.1} parent=1 // pred_fallthru
      _
    // Predicated region
    $region22: #{tpu_custom_call.1} parent=1 // pred_check
      _
    $region23: #{tpu_custom_call.1} parent=1 // pred_check_branch
      %200 = sbr.rel (0) target = $region25
    $region24: #{tpu_custom_call.1} parent=1 // pred_region
      %201 = dma.done [#allocation4], 64
    $region25: #{tpu_custom_call.1} parent=1 // pred_fallthru
      _
    %202 = vsyncpa [#allocation3], 1
    %203 = vsyncpa [#allocation6], 1
    %204 = vsyncpa [#allocation4], 1

// kernel: tpu_custom_call.1
$region0: #{tpu_custom_call.1}
  #allocation0 [shape = 'u32[]', space=smem, size = 0x4, offset = 0x4, fixed_abs, tag = 'smem constant byte address 0x4 - core index']
  #allocation1 [shape = 'u32[144,128]{1,0:T(1,128)}', space=vmem, size = 0x12000, scoped, tag = 'internal scratch']
  %s0 = inlined_call_operand.hbm [shape: s32[4,4], index: 0, kind: input, shape index: {}]
  %s1 = inlined_call_operand.hbm [shape: f32[256,128], index: 1, kind: input, shape index: {}]
  %s2 = inlined_call_operand.hbm [shape: f32[4,128], index: 2, kind: output, shape index: {}]
  %s3 = sld [smem:[#allocation0]]
  $region26: #{tpu_custom_call.1} parent=0
    _
  %s5 = ssub.s32 1, %s3
  %s6 = scalar_select 0, %s5, %s3
  $region1: #{tpu_custom_call.1} parent=0
    #allocation2 [shape = 'u8[2048]{0}', space=vmem, size = 0x800, scoped, tag = 'input window, operand 0, single buffered']
    #allocation3 [shape = 's32[1]{0}', space=sflag, size = 0x4, scoped, tag = 'scoped memory for tpu_custom_call.1']
    #allocation4 [shape = 's32[1]{0}', space=sflag, size = 0x4, scoped, tag = 'scoped memory for tpu_custom_call.1']
    #allocation5 [shape = 'u8[131072]{0}', space=vmem, size = 0x20000, scoped, tag = 'input window, operand 1, single buffered']
    #allocation6 [shape = 's32[1]{0}', space=sflag, size = 0x4, scoped, tag = 'scoped memory for tpu_custom_call.1']
    #allocation7 [shape = 'u8[2048]{0}', space=vmem, size = 0x800, scoped, tag = 'output window, operand 0, single buffered']
    %7 = vsyncpa [#allocation3], 0
    %8 = vsyncpa [#allocation6], 0
    %9 = vsyncpa [#allocation4], 0
    // Predicated region
    $region2: #{tpu_custom_call.1} parent=1 // pred_check
      _
    $region3: #{tpu_custom_call.1} parent=1 // pred_check_branch
      %11 = sbr.rel (0) target = $region5
    $region4: #{tpu_custom_call.1} parent=1 // pred_region
      %s13 = ssub.s32 64, 64
      %14 = vsyncadd [#allocation3], %s13
      %s16 = sshll.u32 [#allocation2], 4
      %s17 = int_to_ptr.vmem [resolvable:$true] %s16
      %19 = dma.hbm_to_vmem [thread:$0]  %s0, 64, %s17, [#allocation3]
    $region5: #{tpu_custom_call.1} parent=1 // pred_fallthru
      _
    // Predicated region
    $region6: #{tpu_custom_call.1} parent=1 // pred_check
      _
    $region7: #{tpu_custom_call.1} parent=1 // pred_check_branch
      %21 = sbr.rel (0) target = $region9
    $region8: #{tpu_custom_call.1} parent=1 // pred_region
      %s23 = ssub.s32 4096, 4096
      %24 = vsyncadd [#allocation6], %s23
      %s25 = sshll.u32 [#allocation5], 4
      %s26 = int_to_ptr.vmem [resolvable:$true] %s25
      %31 = dma.hbm_to_vmem [thread:$0]  %s1, 4096, %s26, [#allocation6], 128, 128, 8
    $region9: #{tpu_custom_call.1} parent=1 // pred_fallthru
      _
    // Predicated region
    $region10: #{tpu_custom_call.1} parent=1 // pred_check
      _
    $region11: #{tpu_custom_call.1} parent=1 // pred_check_branch
      %33 = sbr.rel (0) target = $region13
    $region12: #{tpu_custom_call.1} parent=1 // pred_region
      %34 = dma.done [#allocation3], 64
    $region13: #{tpu_custom_call.1} parent=1 // pred_fallthru
      _
    // Predicated region
    $region14: #{tpu_custom_call.1} parent=1 // pred_check
      _
    $region15: #{tpu_custom_call.1} parent=1 // pred_check_branch
      %36 = sbr.rel (0) target = $region17
    $region16: #{tpu_custom_call.1} parent=1 // pred_region
      %37 = dma.done [#allocation6], 4096
    $region17: #{tpu_custom_call.1} parent=1 // pred_fallthru
      _
    %v38 = vld [vmem:[#allocation2] sm:$0xf]
    %v39 = vlaneseq
    %v40 = vand.u32 %v39, 127
    %v41 = vadd.s32 %v40, 128
    %42 = vset.pattern.permute.xlu0 0
    %43 = vperm.xlu0 %42, %v38
    %v44 = vpop.permute.xlu0 %43
    %vm45 = vcmp.eq.s32.totalorder %v40, %v44
    %vm46 = vcmp.eq.s32.totalorder %v41, %v44
    %v47 = vsel %vm45, 1, 0
    %v48 = vsel %vm46, 1, 0
    %v49 = vcvt.s32.f32 %v47
    %v50 = vcvt.s32.f32 %v48
    %v51 = vadd.f32 %v49, 0.0
    %v52 = vadd.f32 %v50, 0.0
    %53 = vset.pattern.permute.xlu0 1
    %54 = vperm.xlu0 %53, %v38
    %v55 = vpop.permute.xlu0 %54
    %vm56 = vcmp.eq.s32.totalorder %v40, %v55
    %vm57 = vcmp.eq.s32.totalorder %v41, %v55
    %v58 = vsel %vm56, 1, 0
    %v59 = vsel %vm57, 1, 0
    %v60 = vcvt.s32.f32 %v58
    %v61 = vcvt.s32.f32 %v59
    %v62 = vadd.f32 %v51, %v60
    %v63 = vadd.f32 %v52, %v61
    %64 = vset.pattern.permute.xlu0 2
    %65 = vperm.xlu0 %64, %v38
    %v66 = vpop.permute.xlu0 %65
    %vm67 = vcmp.eq.s32.totalorder %v40, %v66
    %vm68 = vcmp.eq.s32.totalorder %v41, %v66
    %v69 = vsel %vm67, 1, 0
    %v70 = vsel %vm68, 1, 0
    %v71 = vcvt.s32.f32 %v69
    %v72 = vcvt.s32.f32 %v70
    %v73 = vadd.f32 %v62, %v71
    %v74 = vadd.f32 %v63, %v72
    %75 = vset.pattern.permute.xlu0 3
    %76 = vperm.xlu0 %75, %v38
    %v77 = vpop.permute.xlu0 %76
    %vm78 = vcmp.eq.s32.totalorder %v40, %v77
    %vm79 = vcmp.eq.s32.totalorder %v41, %v77
    %v80 = vsel %vm78, 1, 0
    %v81 = vsel %vm79, 1, 0
    %v82 = vcvt.s32.f32 %v80
    %v83 = vcvt.s32.f32 %v81
    %v84 = vadd.f32 %v73, %v82
    %v85 = vadd.f32 %v74, %v83
    %v86 = vld [vmem:[#allocation5] sm:$0xff]
    %v87 = vld [vmem:[#allocation5 + $0x8] sm:$0xff]
    %v88 = vld [vmem:[#allocation5 + $0x10] sm:$0xff]
    %v89 = vld [vmem:[#allocation5 + $0x18] sm:$0xff]
    %v90 = vld [vmem:[#allocation5 + $0x20] sm:$0xff]
    %v91 = vld [vmem:[#allocation5 + $0x28] sm:$0xff]
    %v92 = vld [vmem:[#allocation5 + $0x30] sm:$0xff]
    %v93 = vld [vmem:[#allocation5 + $0x38] sm:$0xff]
    %v94 = vld [vmem:[#allocation5 + $0x40] sm:$0xff]
    %v95 = vld [vmem:[#allocation5 + $0x48] sm:$0xff]
    %v96 = vld [vmem:[#allocation5 + $0x50] sm:$0xff]
    %v97 = vld [vmem:[#allocation5 + $0x58] sm:$0xff]
    %v98 = vld [vmem:[#allocation5 + $0x60] sm:$0xff]
    %v99 = vld [vmem:[#allocation5 + $0x68] sm:$0xff]
    %v100 = vld [vmem:[#allocation5 + $0x70] sm:$0xff]
    %v101 = vld [vmem:[#allocation5 + $0x78] sm:$0xff]
    %v102 = vld [vmem:[#allocation5 + $0x80] sm:$0xff]
    %v103 = vld [vmem:[#allocation5 + $0x88] sm:$0xff]
    %v104 = vld [vmem:[#allocation5 + $0x90] sm:$0xff]
    %v105 = vld [vmem:[#allocation5 + $0x98] sm:$0xff]
    %v106 = vld [vmem:[#allocation5 + $0xa0] sm:$0xff]
    %v107 = vld [vmem:[#allocation5 + $0xa8] sm:$0xff]
    %v108 = vld [vmem:[#allocation5 + $0xb0] sm:$0xff]
    %v109 = vld [vmem:[#allocation5 + $0xb8] sm:$0xff]
    %v110 = vld [vmem:[#allocation5 + $0xc0] sm:$0xff]
    %v111 = vld [vmem:[#allocation5 + $0xc8] sm:$0xff]
    %v112 = vld [vmem:[#allocation5 + $0xd0] sm:$0xff]
    %v113 = vld [vmem:[#allocation5 + $0xd8] sm:$0xff]
    %v114 = vld [vmem:[#allocation5 + $0xe0] sm:$0xff]
    %v115 = vld [vmem:[#allocation5 + $0xe8] sm:$0xff]
    %v116 = vld [vmem:[#allocation5 + $0xf0] sm:$0xff]
    %v117 = vld [vmem:[#allocation5 + $0xf8] sm:$0xff]
    %118 = vmatprep.subr.mxu0 0.0
    %119 = vmatpush1.msra.mxu0 %v86
    %120 = vmatprep.subr.mxu0 0.0
    %121 = vmatpush1.msra.mxu0 %v87
    %122 = vmatprep.subr.mxu0 0.0
    %123 = vmatpush1.msra.mxu0 %v88
    %124 = vmatprep.subr.mxu0 0.0
    %125 = vmatpush1.msra.mxu0 %v89
    %126 = vmatprep.subr.mxu0 0.0
    %127 = vmatpush1.msra.mxu0 %v90
    %128 = vmatprep.subr.mxu0 0.0
    %129 = vmatpush1.msra.mxu0 %v91
    %130 = vmatprep.subr.mxu0 0.0
    %131 = vmatpush1.msra.mxu0 %v92
    %132 = vmatprep.subr.mxu0 0.0
    %133 = vmatpush1.msra.mxu0 %v93
    %134 = vmatprep.subr.mxu0 0.0
    %135 = vmatpush1.msra.mxu0 %v94
    %136 = vmatprep.subr.mxu0 0.0
    %137 = vmatpush1.msra.mxu0 %v95
    %138 = vmatprep.subr.mxu0 0.0
    %139 = vmatpush1.msra.mxu0 %v96
    %140 = vmatprep.subr.mxu0 0.0
    %141 = vmatpush1.msra.mxu0 %v97
    %142 = vmatprep.subr.mxu0 0.0
    %143 = vmatpush1.msra.mxu0 %v98
    %144 = vmatprep.subr.mxu0 0.0
    %145 = vmatpush1.msra.mxu0 %v99
    %146 = vmatprep.subr.mxu0 0.0
    %147 = vmatpush1.msra.mxu0 %v100
    %148 = vmatprep.subr.mxu0 0.0
    %149 = vmatpush1.msra.mxu0 %v101
    %150 = vmatprep.subr.mxu0 0.0
    %151 = vmatpush1.msra.mxu0 %v102
    %152 = vmatprep.subr.mxu0 0.0
    %153 = vmatpush1.msra.mxu0 %v103
    %154 = vmatprep.subr.mxu0 0.0
    %155 = vmatpush1.msra.mxu0 %v104
    %156 = vmatprep.subr.mxu0 0.0
    %157 = vmatpush1.msra.mxu0 %v105
    %158 = vmatprep.subr.mxu0 0.0
    %159 = vmatpush1.msra.mxu0 %v106
    %160 = vmatprep.subr.mxu0 0.0
    %161 = vmatpush1.msra.mxu0 %v107
    %162 = vmatprep.subr.mxu0 0.0
    %163 = vmatpush1.msra.mxu0 %v108
    %164 = vmatprep.subr.mxu0 0.0
    %165 = vmatpush1.msra.mxu0 %v109
    %166 = vmatprep.subr.mxu0 0.0
    %167 = vmatpush1.msra.mxu0 %v110
    %168 = vmatprep.subr.mxu0 0.0
    %169 = vmatpush1.msra.mxu0 %v111
    %170 = vmatprep.subr.mxu0 0.0
    %171 = vmatpush1.msra.mxu0 %v112
    %172 = vmatprep.subr.mxu0 0.0
    %173 = vmatpush1.msra.mxu0 %v113
    %174 = vmatprep.subr.mxu0 0.0
    %175 = vmatpush1.msra.mxu0 %v114
    %176 = vmatprep.subr.mxu0 0.0
    %177 = vmatpush1.msra.mxu0 %v115
    %178 = vmatprep.subr.mxu0 0.0
    %179 = vmatpush1.msra.mxu0 %v116
    %180 = vmatprep.subr.mxu0 0.0
    %181 = vmatpush1.msra.mxu0 %v117
    %182 = vmatprep.mubr.f32.mxu0 %v85
    %183 = vmatmul.mubr.f32.gmra.mrb[0].mxu0 %v84
    %v184 = vpop.f32.mrb[0].mxu0
    %v185 = vadd.f32 0.0, %v184
    %v186 = vpop.f32.mrb[0].mxu0
    %187 = vdwg.mxu0
    %188 = vst [vmem:[#allocation7] sm:$0xf] %v185
    // Predicated region
    $region18: #{tpu_custom_call.1} parent=1 // pred_check
      _
    $region19: #{tpu_custom_call.1} parent=1 // pred_check_branch
      %190 = sbr.rel (0) target = $region21
    $region20: #{tpu_custom_call.1} parent=1 // pred_region
      %s192 = ssub.s32 64, 64
      %193 = vsyncadd [#allocation4], %s192
      %s195 = sshll.u32 [#allocation7], 4
      %s196 = int_to_ptr.vmem [resolvable:$true] %s195
      %198 = dma.vmem_to_hbm [thread:$0]  %s196, 64, %s2, [#allocation4]
    $region21: #{tpu_custom_call.1} parent=1 // pred_fallthru
      _
    // Predicated region
    $region22: #{tpu_custom_call.1} parent=1 // pred_check
      _
    $region23: #{tpu_custom_call.1} parent=1 // pred_check_branch
      %200 = sbr.rel (0) target = $region25
    $region24: #{tpu_custom_call.1} parent=1 // pred_region
      %201 = dma.done [#allocation4], 64
    $region25: #{tpu_custom_call.1} parent=1 // pred_fallthru
      _
    %202 = vsyncpa [#allocation3], 1
    %203 = vsyncpa [#allocation6], 1
    %204 = vsyncpa [#allocation4], 1

</llo_original>
